<compile_context>
chip_gen: v5e
topology: v5e:2x2
jax: 0.10.0
libtpu: 0.0.40
codegen_flags: <defaults>
</compile_context>

<pallas_src>
import functools

import jax
import jax.numpy as jnp
from jax.experimental import pallas as pl
from jax.experimental.pallas import tpu as pltpu


def _round_up(x: int, m: int) -> int:
    return ((x + m - 1) // m) * m


def _tensorcores_per_chip() -> int:
    """1 for single-TC generations (v5e / v6e), 2 otherwise (v4 / v5p / v7x megacore)."""
    try:
        kind = jax.devices()[0].device_kind.lower()
    except Exception:
        return 1
    if ("v5e" in kind) or ("v6e" in kind) or ("lite" in kind):
        return 1
    return 2


def _mlp_kernel(x_ref, w_ref, b_ref, out_ref, *, w_shapes, neg_slope):
    """Fused MLP forward on one feature-major batch tile.

    x_ref:   (in_dim, tile_m)             activations, batch on the lane axis
    w_ref:   (n_layers, R, C)             packed weights; layer i valid in [:out_i, :in_i]
    b_ref:   (n_layers, R_b, 1) float32   packed bias columns
    out_ref: (1, out_dim, tile_m)         lane-dense output slab for this tile

    Hidden layers: MXU matmul + column-bias broadcast + LeakyReLU(neg_slope) on the VPU
                   (Dropout(0.1) == identity, eval-mode semantics).
    Final layer:   MXU matmul + bias + exact sigmoid (EUP exp, f32 divide).
    """
    n_layers = len(w_shapes)
    dot_dtype = w_ref.dtype

    h = x_ref[...]                                    # (in_dim, tile_m)

    for i in range(n_layers - 1):
        out_i, in_i = w_shapes[i]
        w = w_ref[i, :out_i, :in_i]                   # (out_i, in_i), sublane-0/lane-0 view
        b = b_ref[i, :out_i, :]                       # (out_i, 1) f32 column
        z = jnp.dot(w, h, preferred_element_type=jnp.float32) + b
        z = jnp.where(z > 0, z, neg_slope * z)        # LeakyReLU(0.2), f32 on the VPU
        # TODO(synk): Dropout(0.1) identity here (eval mode).
        h = z.astype(dot_dtype)                       # no-op in the f32 configuration

    out_i, in_i = w_shapes[-1]
    w = w_ref[n_layers - 1, :out_i, :in_i]            # (out_dim, hidden)
    b = b_ref[n_layers - 1, :out_i, :]                # (out_dim, 1)
    z = jnp.dot(w, h, preferred_element_type=jnp.float32) + b   # (out_dim, tile_m) lane-dense
    z = 1.0 / (1.0 + jnp.exp(-z))                     # exact sigmoid (EUP exp + f32 divide)
    out_ref[0, :, :] = z.astype(out_ref.dtype)


def discriminator_forward(x, weights, biases, *, neg_slope=0.2, tile_m=None,
                          param_dtype=jnp.float32):
    """Discriminator forward pass.

    x:          (B, dims[0]).
    weights[i]: (dims[i], dims[i+1])   (y = x @ W + b, equivalent to nn.Linear).
    biases[i]:  (1, dims[i+1]) or (dims[i+1],).

    param_dtype=jnp.bfloat16 stages x / weights in bf16 for the MXU and DMA (v6e/v7x win)
    while keeping all accumulation and elementwise math in f32.
    """
    B, in_dim = x.shape
    n_layers = len(weights)
    out_dims = [int(w.shape[1]) for w in weights]
    out_dim = out_dims[-1]

    # ---- generation-aware batch tiling ------------------------------------------------
    MAX_TILE_M = 2048
    n_tc = _tensorcores_per_chip()
    if tile_m is None:
        if n_tc >= 2 and B > 128:
            n_tiles = 2 * pl.cdiv(B, 2 * MAX_TILE_M)        # even tile count -> both TCs busy
            tile_m = _round_up(pl.cdiv(B, n_tiles), 128)
        else:
            tile_m = _round_up(min(B, MAX_TILE_M), 8)       # single / few big tiles, 1 TC
    tile_m = max(8, _round_up(int(tile_m), 8))
    padded_B = _round_up(B, tile_m)
    grid_m = padded_B // tile_m
    if grid_m > 1 and tile_m % 128 != 0:
        tile_m = _round_up(tile_m, 128)                     # lane-axis block constraint
        padded_B = _round_up(B, tile_m)
        grid_m = padded_B // tile_m

    # ---- pack parameters into two resident buffers ------------------------------------
    # Weights stored (out_i, in_i), zero-padded and stacked: (n_layers, r_pad, c_pad).
    w_t = [w.T for w in weights]
    r_pad = _round_up(max(int(w.shape[0]) for w in w_t), 8)
    c_pad = _round_up(max(int(w.shape[1]) for w in w_t), 128)
    w_packed = jnp.stack(
        [jnp.pad(w, ((0, r_pad - w.shape[0]), (0, c_pad - w.shape[1]))) for w in w_t]
    ).astype(param_dtype)

    # Bias columns, always f32 (added to f32 accumulators): (n_layers, rb_pad, 1).
    rb_pad = _round_up(max(out_dims), 8)
    b_cols = [jnp.reshape(b, (-1, 1)).astype(jnp.float32) for b in biases]
    b_packed = jnp.stack(
        [jnp.pad(b, ((0, rb_pad - b.shape[0]), (0, 0))) for b in b_cols]
    )

    # Input: cast, zero-pad the batch to a tile multiple (padded rows are zeros -> no NaN
    # hazards, and they are sliced off at the end), presented feature-major.
    x_in = x.astype(param_dtype)
    if padded_B != B:
        x_in = jnp.pad(x_in, ((0, padded_B - B), (0, 0)))
    x_t = x_in.T                                            # (in_dim, padded_B)

    w_shapes = tuple((int(w.shape[0]), int(w.shape[1])) for w in w_t)
    kernel = functools.partial(_mlp_kernel, w_shapes=w_shapes, neg_slope=neg_slope)

    in_specs = [
        pl.BlockSpec((in_dim, tile_m), lambda i: (0, i)),    # x tile, pipelined over batch
        pl.BlockSpec(w_packed.shape, lambda i: (0, 0, 0)),   # resident packed weights
        pl.BlockSpec(b_packed.shape, lambda i: (0, 0, 0)),   # resident packed biases
    ]
    out_spec = pl.BlockSpec((1, out_dim, tile_m), lambda i: (i, 0, 0))

    # Explicit VMEM budget: double-buffered x/out tiles + resident params + activation headroom.
    itemsize = jnp.dtype(param_dtype).itemsize
    max_width = max([in_dim] + out_dims)
    vmem_bytes = (2 * in_dim * tile_m * itemsize
                  + 2 * out_dim * tile_m * 4
                  + 2 * (int(w_packed.size) * itemsize + int(b_packed.size) * 4)
                  + 8 * tile_m * max_width * 4)
    vmem_limit = int(min(max(vmem_bytes, 8 << 20), 32 << 20))

    out = pl.pallas_call(
        kernel,
        out_shape=jax.ShapeDtypeStruct((grid_m, out_dim, tile_m), x.dtype),
        grid_spec=pltpu.PrefetchScalarGridSpec(
            num_scalar_prefetch=0,
            grid=(grid_m,),
            in_specs=in_specs,
            out_specs=out_spec,
        ),
        compiler_params=pltpu.CompilerParams(
            dimension_semantics=("parallel",),
            vmem_limit_bytes=vmem_limit,
        ),
    )(x_t, w_packed, b_packed)

    # (grid, out_dim, tile_m) -> (B, out_dim): layout plumbing only, no compute.
    out = jnp.swapaxes(out, 1, 2).reshape(padded_B, out_dim)
    return out[:B]


def _reference_forward(x, weights, biases, neg_slope=0.2):
    h = x.astype(jnp.float32)
    n = len(weights)
    for i in range(n):
        h = h @ weights[i] + jnp.reshape(biases[i], (1, -1))
        if i < n - 1:
            h = jnp.where(h > 0, h, neg_slope * h)
        else:
            h = jax.nn.sigmoid(h)
    return h


def init_params(key, dims):
    """Deterministic synthetic init for Linear layers (dims[i] -> dims[i+1])."""
    weights, biases = [], []
    for i in range(len(dims) - 1):
        key, kw, kb = jax.random.split(key, 3)
        fan_in = dims[i]
        scale = 1.0 / jnp.sqrt(jnp.float32(fan_in))
        w = jax.random.uniform(kw, (dims[i], dims[i + 1]), jnp.float32, -scale, scale)
        b = jax.random.uniform(kb, (1, dims[i + 1]), jnp.float32, -scale, scale)
        weights.append(w)
        biases.append(b)
    return weights, biases


if __name__ == "__main__":
    # Discriminator(dims=[32, 64, 48, 1]).
    dims = [32, 64, 48, 1]

    key = jax.random.PRNGKey(0)
    key, kx = jax.random.split(key)
    weights, biases = init_params(key, dims)

    # Case 1: small batch (single grid step).
    batch = 8
    x = jax.random.normal(kx, (batch, dims[0]), jnp.float32)
    out = jax.block_until_ready(discriminator_forward(x, weights, biases))
    ref = _reference_forward(x, weights, biases)
    assert out.shape == (batch, dims[-1])
    assert jnp.allclose(out, ref, atol=1e-5, rtol=1e-4), "mismatch vs reference (small batch)"

    # Case 2: larger batch exercising batch padding and (on 2-TC chips) a 2-step parallel grid.
    key, kx2 = jax.random.split(key)
    batch2 = 1000
    x2 = jax.random.normal(kx2, (batch2, dims[0]), jnp.float32)
    out2 = jax.block_until_ready(discriminator_forward(x2, weights, biases))
    ref2 = _reference_forward(x2, weights, biases)
    assert out2.shape == (batch2, dims[-1])
    assert jnp.allclose(out2, ref2, atol=1e-5, rtol=1e-4), "mismatch vs reference (tiled batch)"

    # Case 3: optional bf16 staging of x / weights (v6e/v7x review item); accumulation and
    # elementwise math stay f32, so only bf16 input-rounding error is expected.
    out3 = jax.block_until_ready(
        discriminator_forward(x2, weights, biases, param_dtype=jnp.bfloat16))
    assert out3.shape == (batch2, dims[-1])
    assert jnp.allclose(out3, ref2, atol=5e-2, rtol=5e-2), "mismatch vs reference (bf16 staging)"

    print("KERNEL_OK")
</pallas_src>

<mosaic_0001>
module attributes {stable_mosaic.version = 11 : i64} {
  func.func @_mlp_kernel(%arg0: i32, %arg1: memref<32x8xf32, #tpu.memory_space<vmem>>, %arg2: memref<3x64x128xf32, #tpu.memory_space<vmem>>, %arg3: memref<3x64x1xf32, #tpu.memory_space<vmem>>, %arg4: memref<1x1x8xf32, #tpu.memory_space<vmem>>) attributes {dimension_semantics = [#tpu.dimension_semantics<parallel>], iteration_bounds = array<i64: 1>, scalar_prefetch = 0 : i64, scratch_operands = 0 : i64, tpu.core_type = #tpu.core_type<tc>, window_params = [{transform_indices = @transform_0, window_bounds = array<i64: 32, 8>}, {pipeline_mode = #tpu.pipeline_mode<synchronous>, transform_indices = @transform_1, window_bounds = array<i64: 3, 64, 128>}, {pipeline_mode = #tpu.pipeline_mode<synchronous>, transform_indices = @transform_2, window_bounds = array<i64: 3, 64, 1>}, {transform_indices = @transform_3, window_bounds = array<i64: 1, 1, 8>}]} {
    %c0 = arith.constant 0 : index
    %c0_0 = arith.constant 0 : index
    %0 = vector.load %arg1[%c0, %c0_0] : memref<32x8xf32, #tpu.memory_space<vmem>>, vector<32x8xf32>
    %c0_1 = arith.constant 0 : index
    %c0_2 = arith.constant 0 : index
    %c0_3 = arith.constant 0 : index
    %1 = vector.load %arg2[%c0_1, %c0_2, %c0_3] : memref<3x64x128xf32, #tpu.memory_space<vmem>>, vector<1x64x32xf32>
    %2 = vector.shape_cast %1 : vector<1x64x32xf32> to vector<64x32xf32>
    %c0_4 = arith.constant 0 : index
    %c0_5 = arith.constant 0 : index
    %c0_6 = arith.constant 0 : index
    %3 = vector.load %arg3[%c0_4, %c0_5, %c0_6] : memref<3x64x1xf32, #tpu.memory_space<vmem>>, vector<1x64x1xf32>
    %4 = vector.shape_cast %3 : vector<1x64x1xf32> to vector<64x1xf32>
    %cst = arith.constant dense<0.000000e+00> : vector<64x8xf32>
    %5 = tpu.matmul %2, %0, %cst {dimension_numbers = #tpu.dot_dimension_numbers<[1], [0], [0], [1], [0, 0, 1, 1], [], []>} : vector<64x32xf32>, vector<32x8xf32>, vector<64x8xf32> -> vector<64x8xf32>
    %6 = vector.broadcast %4 : vector<64x1xf32> to vector<64x8xf32>
    %7 = arith.addf %5, %6 : vector<64x8xf32>
    %cst_7 = arith.constant 0.000000e+00 : f32
    %8 = vector.broadcast %cst_7 : f32 to vector<64x8xf32>
    %9 = arith.cmpf ogt, %7, %8 : vector<64x8xf32>
    %cst_8 = arith.constant 2.000000e-01 : f32
    %10 = vector.broadcast %cst_8 : f32 to vector<64x8xf32>
    %11 = arith.mulf %10, %7 : vector<64x8xf32>
    %12 = arith.select %9, %7, %11 : vector<64x8xi1>, vector<64x8xf32>
    %c1 = arith.constant 1 : index
    %c0_9 = arith.constant 0 : index
    %c0_10 = arith.constant 0 : index
    %13 = vector.load %arg2[%c1, %c0_9, %c0_10] : memref<3x64x128xf32, #tpu.memory_space<vmem>>, vector<1x48x64xf32>
    %14 = vector.shape_cast %13 : vector<1x48x64xf32> to vector<48x64xf32>
    %c1_11 = arith.constant 1 : index
    %c0_12 = arith.constant 0 : index
    %c0_13 = arith.constant 0 : index
    %15 = vector.load %arg3[%c1_11, %c0_12, %c0_13] : memref<3x64x1xf32, #tpu.memory_space<vmem>>, vector<1x48x1xf32>
    %16 = vector.shape_cast %15 : vector<1x48x1xf32> to vector<48x1xf32>
    %cst_14 = arith.constant dense<0.000000e+00> : vector<48x8xf32>
    %17 = tpu.matmul %14, %12, %cst_14 {dimension_numbers = #tpu.dot_dimension_numbers<[1], [0], [0], [1], [0, 0, 1, 1], [], []>} : vector<48x64xf32>, vector<64x8xf32>, vector<48x8xf32> -> vector<48x8xf32>
    %18 = vector.broadcast %16 : vector<48x1xf32> to vector<48x8xf32>
    %19 = arith.addf %17, %18 : vector<48x8xf32>
    %cst_15 = arith.constant 0.000000e+00 : f32
    %20 = vector.broadcast %cst_15 : f32 to vector<48x8xf32>
    %21 = arith.cmpf ogt, %19, %20 : vector<48x8xf32>
    %cst_16 = arith.constant 2.000000e-01 : f32
    %22 = vector.broadcast %cst_16 : f32 to vector<48x8xf32>
    %23 = arith.mulf %22, %19 : vector<48x8xf32>
    %24 = arith.select %21, %19, %23 : vector<48x8xi1>, vector<48x8xf32>
    %c2 = arith.constant 2 : index
    %c0_17 = arith.constant 0 : index
    %c0_18 = arith.constant 0 : index
    %25 = vector.load %arg2[%c2, %c0_17, %c0_18] : memref<3x64x128xf32, #tpu.memory_space<vmem>>, vector<1x1x48xf32>
    %26 = vector.shape_cast %25 : vector<1x1x48xf32> to vector<1x48xf32>
    %c2_19 = arith.constant 2 : index
    %c0_20 = arith.constant 0 : index
    %c0_21 = arith.constant 0 : index
    %27 = vector.load %arg3[%c2_19, %c0_20, %c0_21] : memref<3x64x1xf32, #tpu.memory_space<vmem>>, vector<1x1x1xf32>
    %28 = vector.shape_cast %27 : vector<1x1x1xf32> to vector<1x1xf32>
    %cst_22 = arith.constant dense<0.000000e+00> : vector<1x8xf32>
    %29 = tpu.matmul %26, %24, %cst_22 {dimension_numbers = #tpu.dot_dimension_numbers<[1], [0], [0], [1], [0, 0, 1, 1], [], []>} : vector<1x48xf32>, vector<48x8xf32>, vector<1x8xf32> -> vector<1x8xf32>
    %30 = vector.broadcast %28 : vector<1x1xf32> to vector<1x8xf32>
    %31 = arith.addf %29, %30 : vector<1x8xf32>
    %cst_23 = arith.constant 0.000000e+00 : f32
    %32 = vector.broadcast %cst_23 : f32 to vector<1x8xf32>
    %33 = arith.subf %32, %31 : vector<1x8xf32>
    %34 = math.exp %33 : vector<1x8xf32>
    %cst_24 = arith.constant 1.000000e+00 : f32
    %35 = vector.broadcast %cst_24 : f32 to vector<1x8xf32>
    %36 = arith.addf %35, %34 : vector<1x8xf32>
    %cst_25 = arith.constant 1.000000e+00 : f32
    %37 = vector.broadcast %cst_25 : f32 to vector<1x8xf32>
    %38 = arith.divf %37, %36 : vector<1x8xf32>
    %c0_26 = arith.constant 0 : index
    %c0_27 = arith.constant 0 : index
    %c0_28 = arith.constant 0 : index
    %39 = vector.load %arg4[%c0_26, %c0_27, %c0_28] : memref<1x1x8xf32, #tpu.memory_space<vmem>>, vector<1x1x8xf32>
    %40 = vector.shape_cast %39 : vector<1x1x8xf32> to vector<1x8xf32>
    %41 = vector.shape_cast %38 : vector<1x8xf32> to vector<1x1x8xf32>
    tpu.vector_store %arg4[%c0_26, %c0_27, %c0_28], %41 {strides = array<i32>} : memref<1x1x8xf32, #tpu.memory_space<vmem>>, vector<1x1x8xf32>,
    return
  }
  func.func @transform_0(%arg0: i32) -> (i32, i32) {
    %c0_i32 = arith.constant 0 : i32
    %c0_i32_0 = arith.constant 0 : i32
    return %c0_i32, %arg0 : i32, i32
  }
  func.func @transform_1(%arg0: i32) -> (i32, i32, i32) {
    %c0_i32 = arith.constant 0 : i32
    %c0_i32_0 = arith.constant 0 : i32
    %c0_i32_1 = arith.constant 0 : i32
    %c0_i32_2 = arith.constant 0 : i32
    return %c0_i32, %c0_i32_0, %c0_i32_1 : i32, i32, i32
  }
  func.func @transform_2(%arg0: i32) -> (i32, i32, i32) {
    %c0_i32 = arith.constant 0 : i32
    %c0_i32_0 = arith.constant 0 : i32
    %c0_i32_1 = arith.constant 0 : i32
    %c0_i32_2 = arith.constant 0 : i32
    return %c0_i32, %c0_i32_0, %c0_i32_1 : i32, i32, i32
  }
  func.func @transform_3(%arg0: i32) -> (i32, i32, i32) {
    %c0_i32 = arith.constant 0 : i32
    %c0_i32_0 = arith.constant 0 : i32
    %c0_i32_1 = arith.constant 0 : i32
    return %arg0, %c0_i32, %c0_i32_0 : i32, i32, i32
  }
}

</mosaic_0001>

<llo_original>
// kernel: tpu_custom_call.1
$region0: #{tpu_custom_call.1}
  #allocation0 [shape = 'u32[]', space=smem, size = 0x4, offset = 0x4, fixed_abs, tag = 'smem constant byte address 0x4 - core index']
  #allocation1 [shape = 'u32[72,128]{1,0:T(1,128)}', space=vmem, size = 0x9000, scoped, tag = 'internal scratch']
  %s0 = inlined_call_operand.vmem [shape: f32[32,8], index: 0, kind: input, shape index: {}]
  %s1 = inlined_call_operand.vmem [shape: f32[3,64,128], index: 1, kind: input, shape index: {}]
  %s2 = inlined_call_operand.vmem [shape: f32[3,64,1], index: 2, kind: input, shape index: {}]
  %s3 = inlined_call_operand.hbm [shape: f32[1,1,8], index: 3, kind: output, shape index: {}]
  %s4 = sld [smem:[#allocation0]]
  $region22: #{tpu_custom_call.1} parent=0
    _
  %s6 = ssub.s32 1, %s4
  %s7 = scalar_select 0, %s6, %s4
  $region1: #{tpu_custom_call.1} parent=0
    #allocation2 [shape = 'u8[512]{0}', space=vmem, size = 0x400, scoped, tag = 'output window, operand 0, single buffered']
    #allocation3 [shape = 's32[1]{0}', space=sflag, size = 0x4, scoped, tag = 'scoped memory for tpu_custom_call.1']
    %8 = vsyncpa [#allocation3], 0
    // Predicated region
    $region2: #{tpu_custom_call.1} parent=1 // pred_check
      _
    $region3: #{tpu_custom_call.1} parent=1 // pred_check_branch
      %10 = sbr.rel (0) target = $region5
    $region4: #{tpu_custom_call.1} parent=1 // pred_region
      _
    $region5: #{tpu_custom_call.1} parent=1 // pred_fallthru
      _
    // Predicated region
    $region6: #{tpu_custom_call.1} parent=1 // pred_check
      _
    $region7: #{tpu_custom_call.1} parent=1 // pred_check_branch
      %12 = sbr.rel (0) target = $region9
    $region8: #{tpu_custom_call.1} parent=1 // pred_region
      _
    $region9: #{tpu_custom_call.1} parent=1 // pred_fallthru
      _
    // Predicated region
    $region10: #{tpu_custom_call.1} parent=1 // pred_check
      _
    $region11: #{tpu_custom_call.1} parent=1 // pred_check_branch
      %14 = sbr.rel (0) target = $region13
    $region12: #{tpu_custom_call.1} parent=1 // pred_region
      _
    $region13: #{tpu_custom_call.1} parent=1 // pred_fallthru
      _
    %v15 = vld [vmem:[%s0] sm:$0xff]
    %v16 = vld [vmem:[%s0 + $0x8] sm:$0xff]
    %v17 = vld [vmem:[%s0 + $0x10] sm:$0xff]
    %v18 = vld [vmem:[%s0 + $0x18] sm:$0xff]
    %v19 = vld [vmem:[%s1] sm:$0xff]
    %v20 = vld [vmem:[%s1 + $0x8] sm:$0xff]
    %v21 = vld [vmem:[%s1 + $0x10] sm:$0xff]
    %v22 = vld [vmem:[%s1 + $0x18] sm:$0xff]
    %v23 = vld [vmem:[%s1 + $0x20] sm:$0xff]
    %v24 = vld [vmem:[%s1 + $0x28] sm:$0xff]
    %v25 = vld [vmem:[%s1 + $0x30] sm:$0xff]
    %v26 = vld [vmem:[%s1 + $0x38] sm:$0xff]
    %v27 = vld [vmem:[%s2] sm:$0xff]
    %v28 = vld [vmem:[%s2 + $0x8] sm:$0xff]
    %v29 = vld [vmem:[%s2 + $0x10] sm:$0xff]
    %v30 = vld [vmem:[%s2 + $0x18] sm:$0xff]
    %v31 = vld [vmem:[%s2 + $0x20] sm:$0xff]
    %v32 = vld [vmem:[%s2 + $0x28] sm:$0xff]
    %v33 = vld [vmem:[%s2 + $0x30] sm:$0xff]
    %v34 = vld [vmem:[%s2 + $0x38] sm:$0xff]
    %36 = vset.pattern.permute.xlu0 0
    %37 = vperm.xlu0 %36, %v27
    %v38 = vpop.permute.xlu0 %37
    %41 = vset.pattern.permute.xlu0 0
    %42 = vperm.xlu0 %41, %v28
    %v43 = vpop.permute.xlu0 %42
    %46 = vset.pattern.permute.xlu0 0
    %47 = vperm.xlu0 %46, %v29
    %v48 = vpop.permute.xlu0 %47
    %51 = vset.pattern.permute.xlu0 0
    %52 = vperm.xlu0 %51, %v30
    %v53 = vpop.permute.xlu0 %52
    %56 = vset.pattern.permute.xlu0 0
    %57 = vperm.xlu0 %56, %v31
    %v58 = vpop.permute.xlu0 %57
    %61 = vset.pattern.permute.xlu0 0
    %62 = vperm.xlu0 %61, %v32
    %v63 = vpop.permute.xlu0 %62
    %66 = vset.pattern.permute.xlu0 0
    %67 = vperm.xlu0 %66, %v33
    %v68 = vpop.permute.xlu0 %67
    %71 = vset.pattern.permute.xlu0 0
    %72 = vperm.xlu0 %71, %v34
    %v73 = vpop.permute.xlu0 %72
    %vm75 = vcmask 261120
    %v77 = vsel %vm75, %v19, 0
    %v80 = vsel %vm75, %v20, 0
    %v83 = vsel %vm75, %v21, 0
    %v86 = vsel %vm75, %v22, 0
    %v89 = vsel %vm75, %v23, 0
    %v92 = vsel %vm75, %v24, 0
    %v95 = vsel %vm75, %v25, 0
    %v98 = vsel %vm75, %v26, 0
    %100 = vmatpush.msra.mxu0 0.0
    %101 = vmatpush.msra.mxu0 0.0
    %102 = vmatpush.msra.mxu0 0.0
    %103 = vmatpush.msra.mxu0 0.0
    %104 = vmatpush.msra.mxu0 0.0
    %105 = vmatpush.msra.mxu0 0.0
    %106 = vmatpush.msra.mxu0 0.0
    %107 = vmatpush.msra.mxu0 0.0
    %108 = vmatpush.msra.mxu0 0.0
    %109 = vmatpush.msra.mxu0 0.0
    %110 = vmatpush.msra.mxu0 0.0
    %111 = vmatpush.msra.mxu0 0.0
    %112 = vmatpush.msra.mxu0 %v18
    %113 = vmatpush.msra.mxu0 %v17
    %114 = vmatpush.msra.mxu0 %v16
    %115 = vmatpush.msra.mxu0 %v15
    %116 = vmatmul.f32.gmra.mxu0 %v77
    %v117 = vpop.f32.mrf.mxu0
    %v118 = vadd.f32 %v38, %v117
    %119 = vmatmul.f32.gmra.mxu0 %v80
    %v120 = vpop.f32.mrf.mxu0
    %v121 = vadd.f32 %v43, %v120
    %122 = vmatmul.f32.gmra.mxu0 %v83
    %v123 = vpop.f32.mrf.mxu0
    %v124 = vadd.f32 %v48, %v123
    %125 = vmatmul.f32.gmra.mxu0 %v86
    %v126 = vpop.f32.mrf.mxu0
    %v127 = vadd.f32 %v53, %v126
    %128 = vmatmul.f32.gmra.mxu0 %v89
    %v129 = vpop.f32.mrf.mxu0
    %v130 = vadd.f32 %v58, %v129
    %131 = vmatmul.f32.gmra.mxu0 %v92
    %v132 = vpop.f32.mrf.mxu0
    %v133 = vadd.f32 %v63, %v132
    %134 = vmatmul.f32.gmra.mxu0 %v95
    %v135 = vpop.f32.mrf.mxu0
    %v136 = vadd.f32 %v68, %v135
    %137 = vmatmul.f32.gmra.mxu0 %v98
    %v138 = vpop.f32.mrf.mxu0
    %v139 = vadd.f32 %v73, %v138
    %140 = vdwg.mxu0
    %vm141 = vcmp.gt.f32.partialorder %v118, 0.0
    %vm142 = vcmp.gt.f32.partialorder %v121, 0.0
    %vm143 = vcmp.gt.f32.partialorder %v124, 0.0
    %vm144 = vcmp.gt.f32.partialorder %v127, 0.0
    %vm145 = vcmp.gt.f32.partialorder %v130, 0.0
    %vm146 = vcmp.gt.f32.partialorder %v133, 0.0
    %vm147 = vcmp.gt.f32.partialorder %v136, 0.0
    %vm148 = vcmp.gt.f32.partialorder %v139, 0.0
    %v149 = vmul.f32 %v118, 0.2
    %v150 = vmul.f32 %v121, 0.2
    %v151 = vmul.f32 %v124, 0.2
    %v152 = vmul.f32 %v127, 0.2
    %v153 = vmul.f32 %v130, 0.2
    %v154 = vmul.f32 %v133, 0.2
    %v155 = vmul.f32 %v136, 0.2
    %v156 = vmul.f32 %v139, 0.2
    %v157 = vsel %vm141, %v118, %v149
    %v158 = vsel %vm142, %v121, %v150
    %v159 = vsel %vm143, %v124, %v151
    %v160 = vsel %vm144, %v127, %v152
    %v161 = vsel %vm145, %v130, %v153
    %v162 = vsel %vm146, %v133, %v154
    %v163 = vsel %vm147, %v136, %v155
    %v164 = vsel %vm148, %v139, %v156
    %s165 = scalar_lea.vmem %s1, 64
    %v166 = vld [vmem:[%s165] sm:$0xff]
    %v167 = vld [vmem:[%s165 + $0x8] sm:$0xff]
    %v168 = vld [vmem:[%s165 + $0x10] sm:$0xff]
    %v169 = vld [vmem:[%s165 + $0x18] sm:$0xff]
    %v170 = vld [vmem:[%s165 + $0x20] sm:$0xff]
    %v171 = vld [vmem:[%s165 + $0x28] sm:$0xff]
    %s172 = scalar_lea.vmem %s2, 64
    %v173 = vld [vmem:[%s172] sm:$0xff]
    %v174 = vld [vmem:[%s172 + $0x8] sm:$0xff]
    %v175 = vld [vmem:[%s172 + $0x10] sm:$0xff]
    %v176 = vld [vmem:[%s172 + $0x18] sm:$0xff]
    %v177 = vld [vmem:[%s172 + $0x20] sm:$0xff]
    %v178 = vld [vmem:[%s172 + $0x28] sm:$0xff]
    %180 = vset.pattern.permute.xlu0 0
    %181 = vperm.xlu0 %180, %v173
    %v182 = vpop.permute.xlu0 %181
    %185 = vset.pattern.permute.xlu0 0
    %186 = vperm.xlu0 %185, %v174
    %v187 = vpop.permute.xlu0 %186
    %190 = vset.pattern.permute.xlu0 0
    %191 = vperm.xlu0 %190, %v175
    %v192 = vpop.permute.xlu0 %191
    %195 = vset.pattern.permute.xlu0 0
    %196 = vperm.xlu0 %195, %v176
    %v197 = vpop.permute.xlu0 %196
    %200 = vset.pattern.permute.xlu0 0
    %201 = vperm.xlu0 %200, %v177
    %v202 = vpop.permute.xlu0 %201
    %205 = vset.pattern.permute.xlu0 0
    %206 = vperm.xlu0 %205, %v178
    %v207 = vpop.permute.xlu0 %206
    %vm209 = vcmask 523264
    %v211 = vsel %vm209, %v166, 0
    %v214 = vsel %vm209, %v167, 0
    %v217 = vsel %vm209, %v168, 0
    %v220 = vsel %vm209, %v169, 0
    %v223 = vsel %vm209, %v170, 0
    %v226 = vsel %vm209, %v171, 0
    %228 = vmatpush.msra.mxu0 0.0
    %229 = vmatpush.msra.mxu0 0.0
    %230 = vmatpush.msra.mxu0 0.0
    %231 = vmatpush.msra.mxu0 0.0
    %232 = vmatpush.msra.mxu0 0.0
    %233 = vmatpush.msra.mxu0 0.0
    %234 = vmatpush.msra.mxu0 0.0
    %235 = vmatpush.msra.mxu0 0.0
    %236 = vmatpush.msra.mxu0 %v164
    %237 = vmatpush.msra.mxu0 %v163
    %238 = vmatpush.msra.mxu0 %v162
    %239 = vmatpush.msra.mxu0 %v161
    %240 = vmatpush.msra.mxu0 %v160
    %241 = vmatpush.msra.mxu0 %v159
    %242 = vmatpush.msra.mxu0 %v158
    %243 = vmatpush.msra.mxu0 %v157
    %244 = vmatmul.f32.gmra.mxu0 %v211
    %v245 = vpop.f32.mrf.mxu0
    %v246 = vadd.f32 %v182, %v245
    %247 = vmatmul.f32.gmra.mxu0 %v214
    %v248 = vpop.f32.mrf.mxu0
    %v249 = vadd.f32 %v187, %v248
    %250 = vmatmul.f32.gmra.mxu0 %v217
    %v251 = vpop.f32.mrf.mxu0
    %v252 = vadd.f32 %v192, %v251
    %253 = vmatmul.f32.gmra.mxu0 %v220
    %v254 = vpop.f32.mrf.mxu0
    %v255 = vadd.f32 %v197, %v254
    %256 = vmatmul.f32.gmra.mxu0 %v223
    %v257 = vpop.f32.mrf.mxu0
    %v258 = vadd.f32 %v202, %v257
    %259 = vmatmul.f32.gmra.mxu0 %v226
    %v260 = vpop.f32.mrf.mxu0
    %v261 = vadd.f32 %v207, %v260
    %262 = vdwg.mxu0
    %vm263 = vcmp.gt.f32.partialorder %v246, 0.0
    %vm264 = vcmp.gt.f32.partialorder %v249, 0.0
    %vm265 = vcmp.gt.f32.partialorder %v252, 0.0
    %vm266 = vcmp.gt.f32.partialorder %v255, 0.0
    %vm267 = vcmp.gt.f32.partialorder %v258, 0.0
    %vm268 = vcmp.gt.f32.partialorder %v261, 0.0
    %v269 = vmul.f32 %v246, 0.2
    %v270 = vmul.f32 %v249, 0.2
    %v271 = vmul.f32 %v252, 0.2
    %v272 = vmul.f32 %v255, 0.2
    %v273 = vmul.f32 %v258, 0.2
    %v274 = vmul.f32 %v261, 0.2
    %v275 = vsel %vm263, %v246, %v269
    %v276 = vsel %vm264, %v249, %v270
    %v277 = vsel %vm265, %v252, %v271
    %v278 = vsel %vm266, %v255, %v272
    %v279 = vsel %vm267, %v258, %v273
    %v280 = vsel %vm268, %v261, %v274
    %s281 = scalar_lea.vmem %s1, 128
    %v282 = vld [vmem:[%s281] sm:$0x1]
    %s283 = scalar_lea.vmem %s2, 128
    %v284 = vld [vmem:[%s283] sm:$0x1]
    %286 = vset.pattern.permute.xlu0 0
    %287 = vperm.xlu0 %286, %v284
    %v288 = vpop.permute.xlu0 %287
    %vm290 = vcmask 392192
    %v292 = vsel %vm290, %v282, 0
    %294 = vmatpush.msra.mxu0 0.0
    %295 = vmatpush.msra.mxu0 0.0
    %296 = vmatpush.msra.mxu0 0.0
    %297 = vmatpush.msra.mxu0 0.0
    %298 = vmatpush.msra.mxu0 0.0
    %299 = vmatpush.msra.mxu0 0.0
    %300 = vmatpush.msra.mxu0 0.0
    %301 = vmatpush.msra.mxu0 0.0
    %302 = vmatpush.msra.mxu0 0.0
    %303 = vmatpush.msra.mxu0 0.0
    %304 = vmatpush.msra.mxu0 %v280
    %305 = vmatpush.msra.mxu0 %v279
    %306 = vmatpush.msra.mxu0 %v278
    %307 = vmatpush.msra.mxu0 %v277
    %308 = vmatpush.msra.mxu0 %v276
    %309 = vmatpush.msra.mxu0 %v275
    %310 = vmatmul.f32.gmra.mxu0 %v292
    %v311 = vpop.f32.mrf.mxu0
    %v312 = vadd.f32 %v288, %v311
    %313 = vdwg.mxu0
    %v314 = vsub.f32 0.0, %v312
    %v315 = vmul.f32 %v314, 1.442695
    %v316 = vpow.pop %v315
    %v317 = vadd.f32 %v316, 1.0
    %v318 = vrcp.pop %v317
    %v319 = vmul.f32 %v317, %v318
    %v320 = vsub.f32 1.0, %v319
    %v321 = vmul.f32 %v318, %v320
    %v322 = vadd.f32 %v318, %v321
    %vm323 = vweird.f32 %v317
    %vm324 = vweird.f32 %v318
    %vm325 = vmor %vm323, %vm324
    %v326 = vsel %vm325, %v318, %v322
    %v327 = vand.u32 2147483647, %v317
    %vm328 = vcmp.eq.f32.partialorder %v327, 8.507059e+37
    %v329 = vand.u32 %v317, 2147483648
    %v330 = vor.u32 1.1754944e-38, %v329
    %v331 = vsel %vm328, %v330, %v326
    %v332 = vmul.f32 1.0, %v331
    %vm333 = vcmask 57344
    %334 = vst.msk [vmem:[#allocation2] sm:$0x1] %vm333, %v332
    // Predicated region
    $region14: #{tpu_custom_call.1} parent=1 // pred_check
      _
    $region15: #{tpu_custom_call.1} parent=1 // pred_check_branch
      %336 = sbr.rel (0) target = $region17
    $region16: #{tpu_custom_call.1} parent=1 // pred_region
      %338 = vsyncadd [#allocation3], 0
      %s340 = sshll.u32 [#allocation2], 4
      %s341 = int_to_ptr.vmem [resolvable:$true] %s340
      %s342 = sshll.u32 %s3, 4
      %s343 = int_to_ptr.hbm [resolvable:$true] %s342
      %345 = dma.vmem_to_hbm [thread:$0]  %s341, 16, %s343, [#allocation3]
    $region17: #{tpu_custom_call.1} parent=1 // pred_fallthru
      _
    // Predicated region
    $region18: #{tpu_custom_call.1} parent=1 // pred_check
      _
    $region19: #{tpu_custom_call.1} parent=1 // pred_check_branch
      %347 = sbr.rel (0) target = $region21
    $region20: #{tpu_custom_call.1} parent=1 // pred_region
      %349 = dma.done [#allocation3], 16
    $region21: #{tpu_custom_call.1} parent=1 // pred_fallthru
      _
    %350 = vsyncpa [#allocation3], 1

</llo_original>
